<compile_context>
chip_gen: v5e
topology: v5e:2x2
jax: 0.10.0
libtpu: 0.0.40
codegen_flags: <defaults>
</compile_context>

<pallas_src>
import jax
import jax.numpy as jnp
from jax.experimental import pallas as pl
from jax.experimental.pallas import tpu as pltpu


def _round_up(n, m):
    return ((n + m - 1) // m) * m


def _default_grid_steps():
    """v7x has 2 TensorCores per chip -> keep >=2 parallel grid steps.
    v5e/v6e are single-TC -> a 1-step grid avoids per-step loop overhead."""
    try:
        kind = jax.devices()[0].device_kind.lower()
    except Exception:
        return 1
    return 2 if "v7" in kind else 1


def _classifier_kernel(x_ref, w1_ref, b1_ref, w2_ref, b2_ref, o_ref):
    # In-kernel bf16 cast of the activation tile (hidden under DMA/MXU).
    x = x_ref[...].astype(jnp.bfloat16)
    # Layer 1: Linear (bf16 MXU operands, f32 accumulation) + bias + ReLU (f32)
    h = jnp.dot(x, w1_ref[...], preferred_element_type=jnp.float32)
    h = jnp.maximum(h + b1_ref[...], 0.0)           # bias broadcasts over rows
    # Dropout -> identity (eval / inference mode)
    # Layer 2: Linear + bias (bf16 operands into the MXU, f32 accumulation)
    out = jnp.dot(h.astype(w2_ref.dtype), w2_ref[...],
                  preferred_element_type=jnp.float32)
    o_ref[...] = (out + b2_ref[...]).astype(o_ref.dtype)


def prepare_params(v1, g1, b1, v2, g2, b2):
    """ONE-TIME parameter preparation (hoisted out of the per-call path).

    v1: [hid, in] raw weight, g1: scalar, b1: [hid]
    v2: [out, hid] raw weight, g2: scalar, b2: [out]
    Returns (w1_p [in, hid_p] bf16, b1_p [1, hid_p] f32,
             w2_p [hid_p, out] bf16, b2_p [1, out] f32) with hid padded to a
    multiple of 128 (lane-dense intermediate).  Padding is exact: padded hid
    columns give ReLU(0)=0 and the matching zero rows of w2 contribute 0.
    """
    hid, in_dim = v1.shape
    out_dim = v2.shape[0]
    hid_p = _round_up(hid, 128)
    bf16, f32 = jnp.bfloat16, jnp.float32

    # weight_norm with dim=None: W_eff = g * V / ||V||_F  (scalar g per layer)
    w1_eff = (g1 * v1 / jnp.linalg.norm(v1)).T       # [in_dim, hid]
    w2_eff = (g2 * v2 / jnp.linalg.norm(v2)).T       # [hid, out_dim]

    w1_p = jnp.zeros((in_dim, hid_p), bf16).at[:, :hid].set(w1_eff.astype(bf16))
    b1_p = jnp.zeros((1, hid_p), f32).at[:, :hid].set(
        b1.reshape(1, -1).astype(f32))
    w2_p = jnp.zeros((hid_p, out_dim), bf16).at[:hid, :].set(
        w2_eff.astype(bf16))
    b2_p = b2.reshape(1, -1).astype(f32)
    return w1_p, b1_p, w2_p, b2_p


def simple_classifier(x, params, *, block_b=None, num_steps=None):
    """x: [B, in_dim]; params: output of prepare_params -> logits [B, out]."""
    w1_p, b1_p, w2_p, b2_p = params
    B, in_dim = x.shape
    assert w1_p.shape[0] == in_dim
    hid_p = w1_p.shape[1]
    out_dim = w2_p.shape[1]

    # Batch tiling: pad B to a multiple of 8 (not of tb), tb multiple of 8.
    if num_steps is None:
        num_steps = _default_grid_steps()
    b8 = _round_up(B, 8)
    tb = _round_up(pl.cdiv(b8, num_steps), 8)
    if block_b is not None:
        tb = min(tb, _round_up(block_b, 8))
    b_p = _round_up(b8, tb)
    grid = b_p // tb

    x_in = x if b_p == B else jnp.zeros((b_p, in_dim), x.dtype).at[:B].set(x)

    flops = 2 * b_p * (in_dim * hid_p + hid_p * out_dim)
    bytes_accessed = (x_in.size * x_in.dtype.itemsize
                      + w1_p.size * 2 + w2_p.size * 2
                      + b1_p.size * 4 + b2_p.size * 4
                      + b_p * out_dim * 4)

    out = pl.pallas_call(
        _classifier_kernel,
        out_shape=jax.ShapeDtypeStruct((b_p, out_dim), jnp.float32),
        grid_spec=pl.GridSpec(
            grid=(grid,),
            in_specs=[
                pl.BlockSpec((tb, in_dim), lambda i: (i, 0)),      # x tile
                pl.BlockSpec((in_dim, hid_p), lambda i: (0, 0)),   # w1 resident
                pl.BlockSpec((1, hid_p), lambda i: (0, 0)),        # b1 resident
                pl.BlockSpec((hid_p, out_dim), lambda i: (0, 0)),  # w2 resident
                pl.BlockSpec((1, out_dim), lambda i: (0, 0)),      # b2 resident
            ],
            out_specs=pl.BlockSpec((tb, out_dim), lambda i: (i, 0)),
        ),
        compiler_params=pltpu.CompilerParams(
            dimension_semantics=("parallel",),      # shards across TCs on v7x
        ),
        cost_estimate=pl.CostEstimate(
            flops=flops, transcendentals=0, bytes_accessed=bytes_accessed),
    )(x_in, w1_p, b1_p, w2_p, b2_p)

    return out if b_p == B else out[:B]


def make_params(key, in_dim, hid_dim, out_dim, dtype=jnp.float32):
    """Raw weight_norm'd parameters (PyTorch convention, dim=None init)."""
    k1, k2, k3, k4 = jax.random.split(key, 4)
    v1 = jax.random.normal(k1, (hid_dim, in_dim), dtype) * 0.05
    b1 = jax.random.normal(k2, (hid_dim,), dtype) * 0.05
    v2 = jax.random.normal(k3, (out_dim, hid_dim), dtype) * 0.05
    b2 = jax.random.normal(k4, (out_dim,), dtype) * 0.05
    # weight_norm init: g = ||v||_F (scalar, dim=None)
    g1 = jnp.linalg.norm(v1)
    g2 = jnp.linalg.norm(v2)
    return v1, g1, b1, v2, g2, b2


if __name__ == "__main__":
    key = jax.random.PRNGKey(0)
    kx, kp = jax.random.split(key)

    B, in_dim, hid_dim, out_dim = 512, 32, 64, 16
    x = jax.random.normal(kx, (B, in_dim), jnp.float32)
    v1, g1, b1, v2, g2, b2 = make_params(kp, in_dim, hid_dim, out_dim)

    # One-time parameter prep (weight_norm, transpose, pad, bf16 cast).
    params = jax.tree_util.tree_map(
        jax.block_until_ready, prepare_params(v1, g1, b1, v2, g2, b2))

    logits = simple_classifier(x, params)
    jax.block_until_ready(logits)
    assert logits.shape == (B, out_dim)
    assert logits.dtype == jnp.float32

    # Reference mirroring the kernel numerics (bf16 MXU operands, f32 accum,
    # inference-mode dropout = identity).
    w1_eff = (g1 * v1 / jnp.linalg.norm(v1)).T
    w2_eff = (g2 * v2 / jnp.linalg.norm(v2)).T
    h_ref = jnp.maximum(
        jnp.dot(x.astype(jnp.bfloat16), w1_eff.astype(jnp.bfloat16),
                preferred_element_type=jnp.float32) + b1[None, :], 0.0)
    ref = jnp.dot(h_ref.astype(jnp.bfloat16), w2_eff.astype(jnp.bfloat16),
                  preferred_element_type=jnp.float32) + b2[None, :]
    assert jnp.allclose(logits, ref, atol=1e-2, rtol=1e-2)

    print("KERNEL_OK")
</pallas_src>

<mosaic_0001>
module attributes {stable_mosaic.version = 11 : i64} {
  func.func @_classifier_kernel(%arg0: i32, %arg1: memref<512x32xf32, #tpu.memory_space<vmem>>, %arg2: memref<32x128xbf16, #tpu.memory_space<vmem>>, %arg3: memref<1x128xf32, #tpu.memory_space<vmem>>, %arg4: memref<128x16xbf16, #tpu.memory_space<vmem>>, %arg5: memref<1x16xf32, #tpu.memory_space<vmem>>, %arg6: memref<512x16xf32, #tpu.memory_space<vmem>>) attributes {dimension_semantics = [#tpu.dimension_semantics<parallel>], iteration_bounds = array<i64: 1>, scalar_prefetch = 0 : i64, scratch_operands = 0 : i64, tpu.core_type = #tpu.core_type<tc>, window_params = [{transform_indices = @transform_0, window_bounds = array<i64: 512, 32>}, {pipeline_mode = #tpu.pipeline_mode<synchronous>, transform_indices = @transform_1, window_bounds = array<i64: 32, 128>}, {pipeline_mode = #tpu.pipeline_mode<synchronous>, transform_indices = @transform_2, window_bounds = array<i64: 1, 128>}, {pipeline_mode = #tpu.pipeline_mode<synchronous>, transform_indices = @transform_3, window_bounds = array<i64: 128, 16>}, {pipeline_mode = #tpu.pipeline_mode<synchronous>, transform_indices = @transform_4, window_bounds = array<i64: 1, 16>}, {transform_indices = @transform_5, window_bounds = array<i64: 512, 16>}]} {
    %c0 = arith.constant 0 : index
    %c0_0 = arith.constant 0 : index
    %0 = vector.load %arg1[%c0, %c0_0] : memref<512x32xf32, #tpu.memory_space<vmem>>, vector<512x32xf32>
    %1 = arith.truncf %0 : vector<512x32xf32> to vector<512x32xbf16>
    %c0_1 = arith.constant 0 : index
    %c0_2 = arith.constant 0 : index
    %2 = vector.load %arg2[%c0_1, %c0_2] : memref<32x128xbf16, #tpu.memory_space<vmem>>, vector<32x128xbf16>
    %cst = arith.constant dense<0.000000e+00> : vector<512x128xf32>
    %3 = tpu.matmul %1, %2, %cst {dimension_numbers = #tpu.dot_dimension_numbers<[1], [0], [0], [1], [0, 0, 1, 1], [], []>} : vector<512x32xbf16>, vector<32x128xbf16>, vector<512x128xf32> -> vector<512x128xf32>
    %c0_3 = arith.constant 0 : index
    %c0_4 = arith.constant 0 : index
    %4 = vector.load %arg3[%c0_3, %c0_4] : memref<1x128xf32, #tpu.memory_space<vmem>>, vector<1x128xf32>
    %5 = vector.broadcast %4 : vector<1x128xf32> to vector<512x128xf32>
    %6 = arith.addf %3, %5 : vector<512x128xf32>
    %cst_5 = arith.constant 0.000000e+00 : f32
    %7 = vector.broadcast %cst_5 : f32 to vector<512x128xf32>
    %8 = arith.maximumf %6, %7 : vector<512x128xf32>
    %9 = arith.truncf %8 : vector<512x128xf32> to vector<512x128xbf16>
    %c0_6 = arith.constant 0 : index
    %c0_7 = arith.constant 0 : index
    %10 = vector.load %arg4[%c0_6, %c0_7] : memref<128x16xbf16, #tpu.memory_space<vmem>>, vector<128x16xbf16>
    %cst_8 = arith.constant dense<0.000000e+00> : vector<512x16xf32>
    %11 = tpu.matmul %9, %10, %cst_8 {dimension_numbers = #tpu.dot_dimension_numbers<[1], [0], [0], [1], [0, 0, 1, 1], [], []>} : vector<512x128xbf16>, vector<128x16xbf16>, vector<512x16xf32> -> vector<512x16xf32>
    %c0_9 = arith.constant 0 : index
    %c0_10 = arith.constant 0 : index
    %12 = vector.load %arg5[%c0_9, %c0_10] : memref<1x16xf32, #tpu.memory_space<vmem>>, vector<1x16xf32>
    %13 = vector.broadcast %12 : vector<1x16xf32> to vector<512x16xf32>
    %14 = arith.addf %11, %13 : vector<512x16xf32>
    %c0_11 = arith.constant 0 : index
    %c0_12 = arith.constant 0 : index
    %15 = vector.load %arg6[%c0_11, %c0_12] : memref<512x16xf32, #tpu.memory_space<vmem>>, vector<512x16xf32>
    tpu.vector_store %arg6[%c0_11, %c0_12], %14 {strides = array<i32>} : memref<512x16xf32, #tpu.memory_space<vmem>>, vector<512x16xf32>,
    return
  }
  func.func @transform_0(%arg0: i32) -> (i32, i32) {
    %c0_i32 = arith.constant 0 : i32
    %c0_i32_0 = arith.constant 0 : i32
    return %arg0, %c0_i32 : i32, i32
  }
  func.func @transform_1(%arg0: i32) -> (i32, i32) {
    %c0_i32 = arith.constant 0 : i32
    %c0_i32_0 = arith.constant 0 : i32
    %c0_i32_1 = arith.constant 0 : i32
    return %c0_i32, %c0_i32_0 : i32, i32
  }
  func.func @transform_2(%arg0: i32) -> (i32, i32) {
    %c0_i32 = arith.constant 0 : i32
    %c0_i32_0 = arith.constant 0 : i32
    %c0_i32_1 = arith.constant 0 : i32
    return %c0_i32, %c0_i32_0 : i32, i32
  }
  func.func @transform_3(%arg0: i32) -> (i32, i32) {
    %c0_i32 = arith.constant 0 : i32
    %c0_i32_0 = arith.constant 0 : i32
    %c0_i32_1 = arith.constant 0 : i32
    return %c0_i32, %c0_i32_0 : i32, i32
  }
  func.func @transform_4(%arg0: i32) -> (i32, i32) {
    %c0_i32 = arith.constant 0 : i32
    %c0_i32_0 = arith.constant 0 : i32
    %c0_i32_1 = arith.constant 0 : i32
    return %c0_i32, %c0_i32_0 : i32, i32
  }
  func.func @transform_5(%arg0: i32) -> (i32, i32) {
    %c0_i32 = arith.constant 0 : i32
    %c0_i32_0 = arith.constant 0 : i32
    return %arg0, %c0_i32 : i32, i32
  }
}

</mosaic_0001>

<llo_original>
// kernel: tpu_custom_call.1
$region0: #{tpu_custom_call.1}
  #allocation0 [shape = 'u32[]', space=smem, size = 0x4, offset = 0x4, fixed_abs, tag = 'smem constant byte address 0x4 - core index']
  #allocation1 [shape = 'u32[72,128]{1,0:T(1,128)}', space=vmem, size = 0x9000, scoped, tag = 'internal scratch']
  %s0 = inlined_call_operand.vmem [shape: f32[512,32], index: 0, kind: input, shape index: {}]
  %s1 = inlined_call_operand.vmem [shape: bf16[32,128], index: 1, kind: input, shape index: {}]
  %s2 = inlined_call_operand.vmem [shape: f32[1,128], index: 2, kind: input, shape index: {}]
  %s3 = inlined_call_operand.vmem [shape: bf16[128,16], index: 3, kind: input, shape index: {}]
  %s4 = inlined_call_operand.vmem [shape: f32[1,16], index: 4, kind: input, shape index: {}]
  %s5 = inlined_call_operand.vmem [shape: f32[512,16], index: 5, kind: output, shape index: {}]
  %s6 = sld [smem:[#allocation0]]
  $region30: #{tpu_custom_call.1} parent=0
    _
  %s8 = ssub.s32 1, %s6
  %s9 = scalar_select 0, %s8, %s6
  // Predicated region
  $region2: #{tpu_custom_call.1} parent=0 // pred_check
    _
  $region3: #{tpu_custom_call.1} parent=0 // pred_check_branch
    %11 = sbr.rel (0) target = $region5
  $region4: #{tpu_custom_call.1} parent=0 // pred_region
    _
  $region5: #{tpu_custom_call.1} parent=0 // pred_fallthru
    _
  // Predicated region
  $region6: #{tpu_custom_call.1} parent=0 // pred_check
    _
  $region7: #{tpu_custom_call.1} parent=0 // pred_check_branch
    %13 = sbr.rel (0) target = $region9
  $region8: #{tpu_custom_call.1} parent=0 // pred_region
    _
  $region9: #{tpu_custom_call.1} parent=0 // pred_fallthru
    _
  // Predicated region
  $region10: #{tpu_custom_call.1} parent=0 // pred_check
    _
  $region11: #{tpu_custom_call.1} parent=0 // pred_check_branch
    %15 = sbr.rel (0) target = $region13
  $region12: #{tpu_custom_call.1} parent=0 // pred_region
    _
  $region13: #{tpu_custom_call.1} parent=0 // pred_fallthru
    _
  // Predicated region
  $region14: #{tpu_custom_call.1} parent=0 // pred_check
    _
  $region15: #{tpu_custom_call.1} parent=0 // pred_check_branch
    %17 = sbr.rel (0) target = $region17
  $region16: #{tpu_custom_call.1} parent=0 // pred_region
    _
  $region17: #{tpu_custom_call.1} parent=0 // pred_fallthru
    _
  // Predicated region
  $region18: #{tpu_custom_call.1} parent=0 // pred_check
    _
  $region19: #{tpu_custom_call.1} parent=0 // pred_check_branch
    %19 = sbr.rel (0) target = $region21
  $region20: #{tpu_custom_call.1} parent=0 // pred_region
    _
  $region21: #{tpu_custom_call.1} parent=0 // pred_fallthru
    _
  %v21 = vld [vmem:[%s0] sm:$0xff]
  %v22 = vld [vmem:[%s0 + $0x8] sm:$0xff]
  %v23 = vld [vmem:[%s0 + $0x10] sm:$0xff]
  %v24 = vld [vmem:[%s0 + $0x18] sm:$0xff]
  %v25 = vld [vmem:[%s0 + $0x20] sm:$0xff]
  %v26 = vld [vmem:[%s0 + $0x28] sm:$0xff]
  %v27 = vld [vmem:[%s0 + $0x30] sm:$0xff]
  %v28 = vld [vmem:[%s0 + $0x38] sm:$0xff]
  %v29 = vld [vmem:[%s0 + $0x40] sm:$0xff]
  %v30 = vld [vmem:[%s0 + $0x48] sm:$0xff]
  %v31 = vld [vmem:[%s0 + $0x50] sm:$0xff]
  %v32 = vld [vmem:[%s0 + $0x58] sm:$0xff]
  %v33 = vld [vmem:[%s0 + $0x60] sm:$0xff]
  %v34 = vld [vmem:[%s0 + $0x68] sm:$0xff]
  %v35 = vld [vmem:[%s0 + $0x70] sm:$0xff]
  %v36 = vld [vmem:[%s0 + $0x78] sm:$0xff]
  %v37 = vld [vmem:[%s0 + $0x80] sm:$0xff]
  %v38 = vld [vmem:[%s0 + $0x88] sm:$0xff]
  %v39 = vld [vmem:[%s0 + $0x90] sm:$0xff]
  %v40 = vld [vmem:[%s0 + $0x98] sm:$0xff]
  %v41 = vld [vmem:[%s0 + $0xa0] sm:$0xff]
  %v42 = vld [vmem:[%s0 + $0xa8] sm:$0xff]
  %v43 = vld [vmem:[%s0 + $0xb0] sm:$0xff]
  %v44 = vld [vmem:[%s0 + $0xb8] sm:$0xff]
  %v45 = vld [vmem:[%s0 + $0xc0] sm:$0xff]
  %v46 = vld [vmem:[%s0 + $0xc8] sm:$0xff]
  %v47 = vld [vmem:[%s0 + $0xd0] sm:$0xff]
  %v48 = vld [vmem:[%s0 + $0xd8] sm:$0xff]
  %v49 = vld [vmem:[%s0 + $0xe0] sm:$0xff]
  %v50 = vld [vmem:[%s0 + $0xe8] sm:$0xff]
  %v51 = vld [vmem:[%s0 + $0xf0] sm:$0xff]
  %v52 = vld [vmem:[%s0 + $0xf8] sm:$0xff]
  %v53 = vld [vmem:[%s0 + $0x100] sm:$0xff]
  %v54 = vld [vmem:[%s0 + $0x108] sm:$0xff]
  %v55 = vld [vmem:[%s0 + $0x110] sm:$0xff]
  %v56 = vld [vmem:[%s0 + $0x118] sm:$0xff]
  %v57 = vld [vmem:[%s0 + $0x120] sm:$0xff]
  %v58 = vld [vmem:[%s0 + $0x128] sm:$0xff]
  %v59 = vld [vmem:[%s0 + $0x130] sm:$0xff]
  %v60 = vld [vmem:[%s0 + $0x138] sm:$0xff]
  %v61 = vld [vmem:[%s0 + $0x140] sm:$0xff]
  %v62 = vld [vmem:[%s0 + $0x148] sm:$0xff]
  %v63 = vld [vmem:[%s0 + $0x150] sm:$0xff]
  %v64 = vld [vmem:[%s0 + $0x158] sm:$0xff]
  %v65 = vld [vmem:[%s0 + $0x160] sm:$0xff]
  %v66 = vld [vmem:[%s0 + $0x168] sm:$0xff]
  %v67 = vld [vmem:[%s0 + $0x170] sm:$0xff]
  %v68 = vld [vmem:[%s0 + $0x178] sm:$0xff]
  %v69 = vld [vmem:[%s0 + $0x180] sm:$0xff]
  %v70 = vld [vmem:[%s0 + $0x188] sm:$0xff]
  %v71 = vld [vmem:[%s0 + $0x190] sm:$0xff]
  %v72 = vld [vmem:[%s0 + $0x198] sm:$0xff]
  %v73 = vld [vmem:[%s0 + $0x1a0] sm:$0xff]
  %v74 = vld [vmem:[%s0 + $0x1a8] sm:$0xff]
  %v75 = vld [vmem:[%s0 + $0x1b0] sm:$0xff]
  %v76 = vld [vmem:[%s0 + $0x1b8] sm:$0xff]
  %v77 = vld [vmem:[%s0 + $0x1c0] sm:$0xff]
  %v78 = vld [vmem:[%s0 + $0x1c8] sm:$0xff]
  %v79 = vld [vmem:[%s0 + $0x1d0] sm:$0xff]
  %v80 = vld [vmem:[%s0 + $0x1d8] sm:$0xff]
  %v81 = vld [vmem:[%s0 + $0x1e0] sm:$0xff]
  %v82 = vld [vmem:[%s0 + $0x1e8] sm:$0xff]
  %v83 = vld [vmem:[%s0 + $0x1f0] sm:$0xff]
  %v84 = vld [vmem:[%s0 + $0x1f8] sm:$0xff]
  %v85 = vpack.c.bf16 %v22, %v21
  %v86 = vpack.c.bf16 %v24, %v23
  %v87 = vpack.c.bf16 %v26, %v25
  %v88 = vpack.c.bf16 %v28, %v27
  %v89 = vpack.c.bf16 %v30, %v29
  %v90 = vpack.c.bf16 %v32, %v31
  %v91 = vpack.c.bf16 %v34, %v33
  %v92 = vpack.c.bf16 %v36, %v35
  %v93 = vpack.c.bf16 %v38, %v37
  %v94 = vpack.c.bf16 %v40, %v39
  %v95 = vpack.c.bf16 %v42, %v41
  %v96 = vpack.c.bf16 %v44, %v43
  %v97 = vpack.c.bf16 %v46, %v45
  %v98 = vpack.c.bf16 %v48, %v47
  %v99 = vpack.c.bf16 %v50, %v49
  %v100 = vpack.c.bf16 %v52, %v51
  %v101 = vpack.c.bf16 %v54, %v53
  %v102 = vpack.c.bf16 %v56, %v55
  %v103 = vpack.c.bf16 %v58, %v57
  %v104 = vpack.c.bf16 %v60, %v59
  %v105 = vpack.c.bf16 %v62, %v61
  %v106 = vpack.c.bf16 %v64, %v63
  %v107 = vpack.c.bf16 %v66, %v65
  %v108 = vpack.c.bf16 %v68, %v67
  %v109 = vpack.c.bf16 %v70, %v69
  %v110 = vpack.c.bf16 %v72, %v71
  %v111 = vpack.c.bf16 %v74, %v73
  %v112 = vpack.c.bf16 %v76, %v75
  %v113 = vpack.c.bf16 %v78, %v77
  %v114 = vpack.c.bf16 %v80, %v79
  %v115 = vpack.c.bf16 %v82, %v81
  %v116 = vpack.c.bf16 %v84, %v83
  %v117 = vld [vmem:[%s1] sm:$0xf]
  %v118 = vld [vmem:[%s1 + $0x4] sm:$0xf]
  %v119 = vld [vmem:[%s1 + $0x8] sm:$0xf]
  %v120 = vld [vmem:[%s1 + $0xc] sm:$0xf]
  %v121 = vld [vmem:[%s2] sm:$0x1]
  %v123 = vperm.slane %v121, 0
  %v129 = vunpack.c.l.b16 %v117
  %v130 = vunpack.c.l.b16 %v118
  %v131 = vunpack.c.l.b16 %v119
  %v132 = vunpack.c.l.b16 %v120
  %v133 = vpack.c.b16 %v130, %v129
  %v134 = vpack.c.b16 %v132, %v131
  %vm137 = vcmask 261120
  %v139 = vsel %vm137, %v85, 0
  %v142 = vsel %vm137, %v86, 0
  %v145 = vsel %vm137, %v87, 0
  %v148 = vsel %vm137, %v88, 0
  %v151 = vsel %vm137, %v89, 0
  %v154 = vsel %vm137, %v90, 0
  %v157 = vsel %vm137, %v91, 0
  %v160 = vsel %vm137, %v92, 0
  %v163 = vsel %vm137, %v93, 0
  %v166 = vsel %vm137, %v94, 0
  %v169 = vsel %vm137, %v95, 0
  %v172 = vsel %vm137, %v96, 0
  %v175 = vsel %vm137, %v97, 0
  %v178 = vsel %vm137, %v98, 0
  %v181 = vsel %vm137, %v99, 0
  %v184 = vsel %vm137, %v100, 0
  %v187 = vsel %vm137, %v101, 0
  %v190 = vsel %vm137, %v102, 0
  %v193 = vsel %vm137, %v103, 0
  %v196 = vsel %vm137, %v104, 0
  %v199 = vsel %vm137, %v105, 0
  %v202 = vsel %vm137, %v106, 0
  %v205 = vsel %vm137, %v107, 0
  %v208 = vsel %vm137, %v108, 0
  %v211 = vsel %vm137, %v109, 0
  %v214 = vsel %vm137, %v110, 0
  %v217 = vsel %vm137, %v111, 0
  %v220 = vsel %vm137, %v112, 0
  %v223 = vsel %vm137, %v113, 0
  %v226 = vsel %vm137, %v114, 0
  %v229 = vsel %vm137, %v115, 0
  %v232 = vsel %vm137, %v116, 0
  %234 = vmatpush.bf16.msra.mxu0 0
  %235 = vmatpush.bf16.msra.mxu0 0
  %236 = vmatpush.bf16.msra.mxu0 0
  %237 = vmatpush.bf16.msra.mxu0 0
  %238 = vmatpush.bf16.msra.mxu0 0
  %239 = vmatpush.bf16.msra.mxu0 0
  %240 = vmatpush.bf16.msra.mxu0 %v134
  %241 = vmatpush.bf16.msra.mxu0 %v133
  %242 = vmatmul.bf16.gmra.mxu0 %v139
  %v243 = vpop.f32.mrf.mxu0
  %v244 = vadd.f32 %v123, %v243
  %v245 = vpop.f32.mrf.mxu0
  %v246 = vadd.f32 %v123, %v245
  %247 = vmatmul.bf16.gmra.mxu0 %v142
  %v248 = vpop.f32.mrf.mxu0
  %v249 = vadd.f32 %v123, %v248
  %v250 = vpop.f32.mrf.mxu0
  %v251 = vadd.f32 %v123, %v250
  %252 = vmatmul.bf16.gmra.mxu0 %v145
  %v253 = vpop.f32.mrf.mxu0
  %v254 = vadd.f32 %v123, %v253
  %v255 = vpop.f32.mrf.mxu0
  %v256 = vadd.f32 %v123, %v255
  %257 = vmatmul.bf16.gmra.mxu0 %v148
  %v258 = vpop.f32.mrf.mxu0
  %v259 = vadd.f32 %v123, %v258
  %v260 = vpop.f32.mrf.mxu0
  %v261 = vadd.f32 %v123, %v260
  %262 = vmatmul.bf16.gmra.mxu0 %v151
  %v263 = vpop.f32.mrf.mxu0
  %v264 = vadd.f32 %v123, %v263
  %v265 = vpop.f32.mrf.mxu0
  %v266 = vadd.f32 %v123, %v265
  %267 = vmatmul.bf16.gmra.mxu0 %v154
  %v268 = vpop.f32.mrf.mxu0
  %v269 = vadd.f32 %v123, %v268
  %v270 = vpop.f32.mrf.mxu0
  %v271 = vadd.f32 %v123, %v270
  %272 = vmatmul.bf16.gmra.mxu0 %v157
  %v273 = vpop.f32.mrf.mxu0
  %v274 = vadd.f32 %v123, %v273
  %v275 = vpop.f32.mrf.mxu0
  %v276 = vadd.f32 %v123, %v275
  %277 = vmatmul.bf16.gmra.mxu0 %v160
  %v278 = vpop.f32.mrf.mxu0
  %v279 = vadd.f32 %v123, %v278
  %v280 = vpop.f32.mrf.mxu0
  %v281 = vadd.f32 %v123, %v280
  %282 = vmatmul.bf16.gmra.mxu0 %v163
  %v283 = vpop.f32.mrf.mxu0
  %v284 = vadd.f32 %v123, %v283
  %v285 = vpop.f32.mrf.mxu0
  %v286 = vadd.f32 %v123, %v285
  %287 = vmatmul.bf16.gmra.mxu0 %v166
  %v288 = vpop.f32.mrf.mxu0
  %v289 = vadd.f32 %v123, %v288
  %v290 = vpop.f32.mrf.mxu0
  %v291 = vadd.f32 %v123, %v290
  %292 = vmatmul.bf16.gmra.mxu0 %v169
  %v293 = vpop.f32.mrf.mxu0
  %v294 = vadd.f32 %v123, %v293
  %v295 = vpop.f32.mrf.mxu0
  %v296 = vadd.f32 %v123, %v295
  %297 = vmatmul.bf16.gmra.mxu0 %v172
  %v298 = vpop.f32.mrf.mxu0
  %v299 = vadd.f32 %v123, %v298
  %v300 = vpop.f32.mrf.mxu0
  %v301 = vadd.f32 %v123, %v300
  %302 = vmatmul.bf16.gmra.mxu0 %v175
  %v303 = vpop.f32.mrf.mxu0
  %v304 = vadd.f32 %v123, %v303
  %v305 = vpop.f32.mrf.mxu0
  %v306 = vadd.f32 %v123, %v305
  %307 = vmatmul.bf16.gmra.mxu0 %v178
  %v308 = vpop.f32.mrf.mxu0
  %v309 = vadd.f32 %v123, %v308
  %v310 = vpop.f32.mrf.mxu0
  %v311 = vadd.f32 %v123, %v310
  %312 = vmatmul.bf16.gmra.mxu0 %v181
  %v313 = vpop.f32.mrf.mxu0
  %v314 = vadd.f32 %v123, %v313
  %v315 = vpop.f32.mrf.mxu0
  %v316 = vadd.f32 %v123, %v315
  %317 = vmatmul.bf16.gmra.mxu0 %v184
  %v318 = vpop.f32.mrf.mxu0
  %v319 = vadd.f32 %v123, %v318
  %v320 = vpop.f32.mrf.mxu0
  %v321 = vadd.f32 %v123, %v320
  %322 = vmatmul.bf16.gmra.mxu0 %v187
  %v323 = vpop.f32.mrf.mxu0
  %v324 = vadd.f32 %v123, %v323
  %v325 = vpop.f32.mrf.mxu0
  %v326 = vadd.f32 %v123, %v325
  %327 = vmatmul.bf16.gmra.mxu0 %v190
  %v328 = vpop.f32.mrf.mxu0
  %v329 = vadd.f32 %v123, %v328
  %v330 = vpop.f32.mrf.mxu0
  %v331 = vadd.f32 %v123, %v330
  %332 = vmatmul.bf16.gmra.mxu0 %v193
  %v333 = vpop.f32.mrf.mxu0
  %v334 = vadd.f32 %v123, %v333
  %v335 = vpop.f32.mrf.mxu0
  %v336 = vadd.f32 %v123, %v335
  %337 = vmatmul.bf16.gmra.mxu0 %v196
  %v338 = vpop.f32.mrf.mxu0
  %v339 = vadd.f32 %v123, %v338
  %v340 = vpop.f32.mrf.mxu0
  %v341 = vadd.f32 %v123, %v340
  %342 = vmatmul.bf16.gmra.mxu0 %v199
  %v343 = vpop.f32.mrf.mxu0
  %v344 = vadd.f32 %v123, %v343
  %v345 = vpop.f32.mrf.mxu0
  %v346 = vadd.f32 %v123, %v345
  %347 = vmatmul.bf16.gmra.mxu0 %v202
  %v348 = vpop.f32.mrf.mxu0
  %v349 = vadd.f32 %v123, %v348
  %v350 = vpop.f32.mrf.mxu0
  %v351 = vadd.f32 %v123, %v350
  %352 = vmatmul.bf16.gmra.mxu0 %v205
  %v353 = vpop.f32.mrf.mxu0
  %v354 = vadd.f32 %v123, %v353
  %v355 = vpop.f32.mrf.mxu0
  %v356 = vadd.f32 %v123, %v355
  %357 = vmatmul.bf16.gmra.mxu0 %v208
  %v358 = vpop.f32.mrf.mxu0
  %v359 = vadd.f32 %v123, %v358
  %v360 = vpop.f32.mrf.mxu0
  %v361 = vadd.f32 %v123, %v360
  %362 = vmatmul.bf16.gmra.mxu0 %v211
  %v363 = vpop.f32.mrf.mxu0
  %v364 = vadd.f32 %v123, %v363
  %v365 = vpop.f32.mrf.mxu0
  %v366 = vadd.f32 %v123, %v365
  %367 = vmatmul.bf16.gmra.mxu0 %v214
  %v368 = vpop.f32.mrf.mxu0
  %v369 = vadd.f32 %v123, %v368
  %v370 = vpop.f32.mrf.mxu0
  %v371 = vadd.f32 %v123, %v370
  %372 = vmatmul.bf16.gmra.mxu0 %v217
  %v373 = vpop.f32.mrf.mxu0
  %v374 = vadd.f32 %v123, %v373
  %v375 = vpop.f32.mrf.mxu0
  %v376 = vadd.f32 %v123, %v375
  %377 = vmatmul.bf16.gmra.mxu0 %v220
  %v378 = vpop.f32.mrf.mxu0
  %v379 = vadd.f32 %v123, %v378
  %v380 = vpop.f32.mrf.mxu0
  %v381 = vadd.f32 %v123, %v380
  %382 = vmatmul.bf16.gmra.mxu0 %v223
  %v383 = vpop.f32.mrf.mxu0
  %v384 = vadd.f32 %v123, %v383
  %v385 = vpop.f32.mrf.mxu0
  %v386 = vadd.f32 %v123, %v385
  %387 = vmatmul.bf16.gmra.mxu0 %v226
  %v388 = vpop.f32.mrf.mxu0
  %v389 = vadd.f32 %v123, %v388
  %v390 = vpop.f32.mrf.mxu0
  %v391 = vadd.f32 %v123, %v390
  %392 = vmatmul.bf16.gmra.mxu0 %v229
  %v393 = vpop.f32.mrf.mxu0
  %v394 = vadd.f32 %v123, %v393
  %v395 = vpop.f32.mrf.mxu0
  %v396 = vadd.f32 %v123, %v395
  %397 = vmatmul.bf16.gmra.mxu0 %v232
  %v398 = vpop.f32.mrf.mxu0
  %v399 = vadd.f32 %v123, %v398
  %v400 = vpop.f32.mrf.mxu0
  %v401 = vadd.f32 %v123, %v400
  %402 = vdwg.mxu0
  %v403 = vmax.f32 %v244, 0.0
  %v404 = vmax.f32 %v246, 0.0
  %v405 = vmax.f32 %v249, 0.0
  %v406 = vmax.f32 %v251, 0.0
  %v407 = vmax.f32 %v254, 0.0
  %v408 = vmax.f32 %v256, 0.0
  %v409 = vmax.f32 %v259, 0.0
  %v410 = vmax.f32 %v261, 0.0
  %v411 = vmax.f32 %v264, 0.0
  %v412 = vmax.f32 %v266, 0.0
  %v413 = vmax.f32 %v269, 0.0
  %v414 = vmax.f32 %v271, 0.0
  %v415 = vmax.f32 %v274, 0.0
  %v416 = vmax.f32 %v276, 0.0
  %v417 = vmax.f32 %v279, 0.0
  %v418 = vmax.f32 %v281, 0.0
  %v419 = vmax.f32 %v284, 0.0
  %v420 = vmax.f32 %v286, 0.0
  %v421 = vmax.f32 %v289, 0.0
  %v422 = vmax.f32 %v291, 0.0
  %v423 = vmax.f32 %v294, 0.0
  %v424 = vmax.f32 %v296, 0.0
  %v425 = vmax.f32 %v299, 0.0
  %v426 = vmax.f32 %v301, 0.0
  %v427 = vmax.f32 %v304, 0.0
  %v428 = vmax.f32 %v306, 0.0
  %v429 = vmax.f32 %v309, 0.0
  %v430 = vmax.f32 %v311, 0.0
  %v431 = vmax.f32 %v314, 0.0
  %v432 = vmax.f32 %v316, 0.0
  %v433 = vmax.f32 %v319, 0.0
  %v434 = vmax.f32 %v321, 0.0
  %v435 = vmax.f32 %v324, 0.0
  %v436 = vmax.f32 %v326, 0.0
  %v437 = vmax.f32 %v329, 0.0
  %v438 = vmax.f32 %v331, 0.0
  %v439 = vmax.f32 %v334, 0.0
  %v440 = vmax.f32 %v336, 0.0
  %v441 = vmax.f32 %v339, 0.0
  %v442 = vmax.f32 %v341, 0.0
  %v443 = vmax.f32 %v344, 0.0
  %v444 = vmax.f32 %v346, 0.0
  %v445 = vmax.f32 %v349, 0.0
  %v446 = vmax.f32 %v351, 0.0
  %v447 = vmax.f32 %v354, 0.0
  %v448 = vmax.f32 %v356, 0.0
  %v449 = vmax.f32 %v359, 0.0
  %v450 = vmax.f32 %v361, 0.0
  %v451 = vmax.f32 %v364, 0.0
  %v452 = vmax.f32 %v366, 0.0
  %v453 = vmax.f32 %v369, 0.0
  %v454 = vmax.f32 %v371, 0.0
  %v455 = vmax.f32 %v374, 0.0
  %v456 = vmax.f32 %v376, 0.0
  %v457 = vmax.f32 %v379, 0.0
  %v458 = vmax.f32 %v381, 0.0
  %v459 = vmax.f32 %v384, 0.0
  %v460 = vmax.f32 %v386, 0.0
  %v461 = vmax.f32 %v389, 0.0
  %v462 = vmax.f32 %v391, 0.0
  %v463 = vmax.f32 %v394, 0.0
  %v464 = vmax.f32 %v396, 0.0
  %v465 = vmax.f32 %v399, 0.0
  %v466 = vmax.f32 %v401, 0.0
  %v467 = vpack.c.bf16 %v404, %v403
  %v468 = vpack.c.bf16 %v406, %v405
  %v469 = vpack.c.bf16 %v408, %v407
  %v470 = vpack.c.bf16 %v410, %v409
  %v471 = vpack.c.bf16 %v412, %v411
  %v472 = vpack.c.bf16 %v414, %v413
  %v473 = vpack.c.bf16 %v416, %v415
  %v474 = vpack.c.bf16 %v418, %v417
  %v475 = vpack.c.bf16 %v420, %v419
  %v476 = vpack.c.bf16 %v422, %v421
  %v477 = vpack.c.bf16 %v424, %v423
  %v478 = vpack.c.bf16 %v426, %v425
  %v479 = vpack.c.bf16 %v428, %v427
  %v480 = vpack.c.bf16 %v430, %v429
  %v481 = vpack.c.bf16 %v432, %v431
  %v482 = vpack.c.bf16 %v434, %v433
  %v483 = vpack.c.bf16 %v436, %v435
  %v484 = vpack.c.bf16 %v438, %v437
  %v485 = vpack.c.bf16 %v440, %v439
  %v486 = vpack.c.bf16 %v442, %v441
  %v487 = vpack.c.bf16 %v444, %v443
  %v488 = vpack.c.bf16 %v446, %v445
  %v489 = vpack.c.bf16 %v448, %v447
  %v490 = vpack.c.bf16 %v450, %v449
  %v491 = vpack.c.bf16 %v452, %v451
  %v492 = vpack.c.bf16 %v454, %v453
  %v493 = vpack.c.bf16 %v456, %v455
  %v494 = vpack.c.bf16 %v458, %v457
  %v495 = vpack.c.bf16 %v460, %v459
  %v496 = vpack.c.bf16 %v462, %v461
  %v497 = vpack.c.bf16 %v464, %v463
  %v498 = vpack.c.bf16 %v466, %v465
  %v499 = vld [vmem:[%s3] sm:$0xf]
  %v500 = vld [vmem:[%s3 + $0x4] sm:$0xf]
  %v501 = vld [vmem:[%s3 + $0x8] sm:$0xf]
  %v502 = vld [vmem:[%s3 + $0xc] sm:$0xf]
  %v503 = vld [vmem:[%s3 + $0x10] sm:$0xf]
  %v504 = vld [vmem:[%s3 + $0x14] sm:$0xf]
  %v505 = vld [vmem:[%s3 + $0x18] sm:$0xf]
  %v506 = vld [vmem:[%s3 + $0x1c] sm:$0xf]
  %v507 = vld [vmem:[%s3 + $0x20] sm:$0xf]
  %v508 = vld [vmem:[%s3 + $0x24] sm:$0xf]
  %v509 = vld [vmem:[%s3 + $0x28] sm:$0xf]
  %v510 = vld [vmem:[%s3 + $0x2c] sm:$0xf]
  %v511 = vld [vmem:[%s3 + $0x30] sm:$0xf]
  %v512 = vld [vmem:[%s3 + $0x34] sm:$0xf]
  %v513 = vld [vmem:[%s3 + $0x38] sm:$0xf]
  %v514 = vld [vmem:[%s3 + $0x3c] sm:$0xf]
  %v515 = vld [vmem:[%s4] sm:$0x1]
  %v517 = vperm.slane %v515, 0
  %v535 = vunpack.c.l.b16 %v499
  %v536 = vunpack.c.l.b16 %v500
  %v537 = vunpack.c.l.b16 %v501
  %v538 = vunpack.c.l.b16 %v502
  %v539 = vunpack.c.l.b16 %v503
  %v540 = vunpack.c.l.b16 %v504
  %v541 = vunpack.c.l.b16 %v505
  %v542 = vunpack.c.l.b16 %v506
  %v543 = vunpack.c.l.b16 %v507
  %v544 = vunpack.c.l.b16 %v508
  %v545 = vunpack.c.l.b16 %v509
  %v546 = vunpack.c.l.b16 %v510
  %v547 = vunpack.c.l.b16 %v511
  %v548 = vunpack.c.l.b16 %v512
  %v549 = vunpack.c.l.b16 %v513
  %v550 = vunpack.c.l.b16 %v514
  %v551 = vpack.c.b16 %v536, %v535
  %v552 = vpack.c.b16 %v538, %v537
  %v553 = vpack.c.b16 %v540, %v539
  %v554 = vpack.c.b16 %v542, %v541
  %v555 = vpack.c.b16 %v544, %v543
  %v556 = vpack.c.b16 %v546, %v545
  %v557 = vpack.c.b16 %v548, %v547
  %v558 = vpack.c.b16 %v550, %v549
  %567 = vmatpush.bf16.msra.mxu0 %v558
  %568 = vmatpush.bf16.msra.mxu0 %v557
  %569 = vmatpush.bf16.msra.mxu0 %v556
  %570 = vmatpush.bf16.msra.mxu0 %v555
  %571 = vmatpush.bf16.msra.mxu0 %v554
  %572 = vmatpush.bf16.msra.mxu0 %v553
  %573 = vmatpush.bf16.msra.mxu0 %v552
  %574 = vmatpush.bf16.msra.mxu0 %v551
  %575 = vmatmul.bf16.gmra.mxu0 %v467
  %v576 = vpop.f32.mrf.mxu0
  %v577 = vadd.f32 %v517, %v576
  %v578 = vpop.f32.mrf.mxu0
  %v579 = vadd.f32 %v517, %v578
  %580 = vmatmul.bf16.gmra.mxu0 %v468
  %v581 = vpop.f32.mrf.mxu0
  %v582 = vadd.f32 %v517, %v581
  %v583 = vpop.f32.mrf.mxu0
  %v584 = vadd.f32 %v517, %v583
  %585 = vmatmul.bf16.gmra.mxu0 %v469
  %v586 = vpop.f32.mrf.mxu0
  %v587 = vadd.f32 %v517, %v586
  %v588 = vpop.f32.mrf.mxu0
  %v589 = vadd.f32 %v517, %v588
  %590 = vmatmul.bf16.gmra.mxu0 %v470
  %v591 = vpop.f32.mrf.mxu0
  %v592 = vadd.f32 %v517, %v591
  %v593 = vpop.f32.mrf.mxu0
  %v594 = vadd.f32 %v517, %v593
  %595 = vmatmul.bf16.gmra.mxu0 %v471
  %v596 = vpop.f32.mrf.mxu0
  %v597 = vadd.f32 %v517, %v596
  %v598 = vpop.f32.mrf.mxu0
  %v599 = vadd.f32 %v517, %v598
  %600 = vmatmul.bf16.gmra.mxu0 %v472
  %v601 = vpop.f32.mrf.mxu0
  %v602 = vadd.f32 %v517, %v601
  %v603 = vpop.f32.mrf.mxu0
  %v604 = vadd.f32 %v517, %v603
  %605 = vmatmul.bf16.gmra.mxu0 %v473
  %v606 = vpop.f32.mrf.mxu0
  %v607 = vadd.f32 %v517, %v606
  %v608 = vpop.f32.mrf.mxu0
  %v609 = vadd.f32 %v517, %v608
  %610 = vmatmul.bf16.gmra.mxu0 %v474
  %v611 = vpop.f32.mrf.mxu0
  %v612 = vadd.f32 %v517, %v611
  %v613 = vpop.f32.mrf.mxu0
  %v614 = vadd.f32 %v517, %v613
  %615 = vmatmul.bf16.gmra.mxu0 %v475
  %v616 = vpop.f32.mrf.mxu0
  %v617 = vadd.f32 %v517, %v616
  %v618 = vpop.f32.mrf.mxu0
  %v619 = vadd.f32 %v517, %v618
  %620 = vmatmul.bf16.gmra.mxu0 %v476
  %v621 = vpop.f32.mrf.mxu0
  %v622 = vadd.f32 %v517, %v621
  %v623 = vpop.f32.mrf.mxu0
  %v624 = vadd.f32 %v517, %v623
  %625 = vmatmul.bf16.gmra.mxu0 %v477
  %v626 = vpop.f32.mrf.mxu0
  %v627 = vadd.f32 %v517, %v626
  %v628 = vpop.f32.mrf.mxu0
  %v629 = vadd.f32 %v517, %v628
  %630 = vmatmul.bf16.gmra.mxu0 %v478
  %v631 = vpop.f32.mrf.mxu0
  %v632 = vadd.f32 %v517, %v631
  %v633 = vpop.f32.mrf.mxu0
  %v634 = vadd.f32 %v517, %v633
  %635 = vmatmul.bf16.gmra.mxu0 %v479
  %v636 = vpop.f32.mrf.mxu0
  %v637 = vadd.f32 %v517, %v636
  %v638 = vpop.f32.mrf.mxu0
  %v639 = vadd.f32 %v517, %v638
  %640 = vmatmul.bf16.gmra.mxu0 %v480
  %v641 = vpop.f32.mrf.mxu0
  %v642 = vadd.f32 %v517, %v641
  %v643 = vpop.f32.mrf.mxu0
  %v644 = vadd.f32 %v517, %v643
  %645 = vmatmul.bf16.gmra.mxu0 %v481
  %v646 = vpop.f32.mrf.mxu0
  %v647 = vadd.f32 %v517, %v646
  %v648 = vpop.f32.mrf.mxu0
  %v649 = vadd.f32 %v517, %v648
  %650 = vmatmul.bf16.gmra.mxu0 %v482
  %v651 = vpop.f32.mrf.mxu0
  %v652 = vadd.f32 %v517, %v651
  %v653 = vpop.f32.mrf.mxu0
  %v654 = vadd.f32 %v517, %v653
  %655 = vmatmul.bf16.gmra.mxu0 %v483
  %v656 = vpop.f32.mrf.mxu0
  %v657 = vadd.f32 %v517, %v656
  %v658 = vpop.f32.mrf.mxu0
  %v659 = vadd.f32 %v517, %v658
  %660 = vmatmul.bf16.gmra.mxu0 %v484
  %v661 = vpop.f32.mrf.mxu0
  %v662 = vadd.f32 %v517, %v661
  %v663 = vpop.f32.mrf.mxu0
  %v664 = vadd.f32 %v517, %v663
  %665 = vmatmul.bf16.gmra.mxu0 %v485
  %v666 = vpop.f32.mrf.mxu0
  %v667 = vadd.f32 %v517, %v666
  %v668 = vpop.f32.mrf.mxu0
  %v669 = vadd.f32 %v517, %v668
  %670 = vmatmul.bf16.gmra.mxu0 %v486
  %v671 = vpop.f32.mrf.mxu0
  %v672 = vadd.f32 %v517, %v671
  %v673 = vpop.f32.mrf.mxu0
  %v674 = vadd.f32 %v517, %v673
  %675 = vmatmul.bf16.gmra.mxu0 %v487
  %v676 = vpop.f32.mrf.mxu0
  %v677 = vadd.f32 %v517, %v676
  %v678 = vpop.f32.mrf.mxu0
  %v679 = vadd.f32 %v517, %v678
  %680 = vmatmul.bf16.gmra.mxu0 %v488
  %v681 = vpop.f32.mrf.mxu0
  %v682 = vadd.f32 %v517, %v681
  %v683 = vpop.f32.mrf.mxu0
  %v684 = vadd.f32 %v517, %v683
  %685 = vmatmul.bf16.gmra.mxu0 %v489
  %v686 = vpop.f32.mrf.mxu0
  %v687 = vadd.f32 %v517, %v686
  %v688 = vpop.f32.mrf.mxu0
  %v689 = vadd.f32 %v517, %v688
  %690 = vmatmul.bf16.gmra.mxu0 %v490
  %v691 = vpop.f32.mrf.mxu0
  %v692 = vadd.f32 %v517, %v691
  %v693 = vpop.f32.mrf.mxu0
  %v694 = vadd.f32 %v517, %v693
  %695 = vmatmul.bf16.gmra.mxu0 %v491
  %v696 = vpop.f32.mrf.mxu0
  %v697 = vadd.f32 %v517, %v696
  %v698 = vpop.f32.mrf.mxu0
  %v699 = vadd.f32 %v517, %v698
  %700 = vmatmul.bf16.gmra.mxu0 %v492
  %v701 = vpop.f32.mrf.mxu0
  %v702 = vadd.f32 %v517, %v701
  %v703 = vpop.f32.mrf.mxu0
  %v704 = vadd.f32 %v517, %v703
  %705 = vmatmul.bf16.gmra.mxu0 %v493
  %v706 = vpop.f32.mrf.mxu0
  %v707 = vadd.f32 %v517, %v706
  %v708 = vpop.f32.mrf.mxu0
  %v709 = vadd.f32 %v517, %v708
  %710 = vmatmul.bf16.gmra.mxu0 %v494
  %v711 = vpop.f32.mrf.mxu0
  %v712 = vadd.f32 %v517, %v711
  %v713 = vpop.f32.mrf.mxu0
  %v714 = vadd.f32 %v517, %v713
  %715 = vmatmul.bf16.gmra.mxu0 %v495
  %v716 = vpop.f32.mrf.mxu0
  %v717 = vadd.f32 %v517, %v716
  %v718 = vpop.f32.mrf.mxu0
  %v719 = vadd.f32 %v517, %v718
  %720 = vmatmul.bf16.gmra.mxu0 %v496
  %v721 = vpop.f32.mrf.mxu0
  %v722 = vadd.f32 %v517, %v721
  %v723 = vpop.f32.mrf.mxu0
  %v724 = vadd.f32 %v517, %v723
  %725 = vmatmul.bf16.gmra.mxu0 %v497
  %v726 = vpop.f32.mrf.mxu0
  %v727 = vadd.f32 %v517, %v726
  %v728 = vpop.f32.mrf.mxu0
  %v729 = vadd.f32 %v517, %v728
  %730 = vmatmul.bf16.gmra.mxu0 %v498
  %v731 = vpop.f32.mrf.mxu0
  %v732 = vadd.f32 %v517, %v731
  %v733 = vpop.f32.mrf.mxu0
  %v734 = vadd.f32 %v517, %v733
  %735 = vdwg.mxu0
  %vm736 = vcmask 130048
  %737 = vst.msk [vmem:[%s5] sm:$0xff] %vm736, %v577
  %738 = vst.msk [vmem:[%s5 + $0x8] sm:$0xff] %vm736, %v579
  %739 = vst.msk [vmem:[%s5 + $0x10] sm:$0xff] %vm736, %v582
  %740 = vst.msk [vmem:[%s5 + $0x18] sm:$0xff] %vm736, %v584
  %741 = vst.msk [vmem:[%s5 + $0x20] sm:$0xff] %vm736, %v587
  %742 = vst.msk [vmem:[%s5 + $0x28] sm:$0xff] %vm736, %v589
  %743 = vst.msk [vmem:[%s5 + $0x30] sm:$0xff] %vm736, %v592
  %744 = vst.msk [vmem:[%s5 + $0x38] sm:$0xff] %vm736, %v594
  %745 = vst.msk [vmem:[%s5 + $0x40] sm:$0xff] %vm736, %v597
  %746 = vst.msk [vmem:[%s5 + $0x48] sm:$0xff] %vm736, %v599
  %747 = vst.msk [vmem:[%s5 + $0x50] sm:$0xff] %vm736, %v602
  %748 = vst.msk [vmem:[%s5 + $0x58] sm:$0xff] %vm736, %v604
  %749 = vst.msk [vmem:[%s5 + $0x60] sm:$0xff] %vm736, %v607
  %750 = vst.msk [vmem:[%s5 + $0x68] sm:$0xff] %vm736, %v609
  %751 = vst.msk [vmem:[%s5 + $0x70] sm:$0xff] %vm736, %v612
  %752 = vst.msk [vmem:[%s5 + $0x78] sm:$0xff] %vm736, %v614
  %753 = vst.msk [vmem:[%s5 + $0x80] sm:$0xff] %vm736, %v617
  %754 = vst.msk [vmem:[%s5 + $0x88] sm:$0xff] %vm736, %v619
  %755 = vst.msk [vmem:[%s5 + $0x90] sm:$0xff] %vm736, %v622
  %756 = vst.msk [vmem:[%s5 + $0x98] sm:$0xff] %vm736, %v624
  %757 = vst.msk [vmem:[%s5 + $0xa0] sm:$0xff] %vm736, %v627
  %758 = vst.msk [vmem:[%s5 + $0xa8] sm:$0xff] %vm736, %v629
  %759 = vst.msk [vmem:[%s5 + $0xb0] sm:$0xff] %vm736, %v632
  %760 = vst.msk [vmem:[%s5 + $0xb8] sm:$0xff] %vm736, %v634
  %761 = vst.msk [vmem:[%s5 + $0xc0] sm:$0xff] %vm736, %v637
  %762 = vst.msk [vmem:[%s5 + $0xc8] sm:$0xff] %vm736, %v639
  %763 = vst.msk [vmem:[%s5 + $0xd0] sm:$0xff] %vm736, %v642
  %764 = vst.msk [vmem:[%s5 + $0xd8] sm:$0xff] %vm736, %v644
  %765 = vst.msk [vmem:[%s5 + $0xe0] sm:$0xff] %vm736, %v647
  %766 = vst.msk [vmem:[%s5 + $0xe8] sm:$0xff] %vm736, %v649
  %767 = vst.msk [vmem:[%s5 + $0xf0] sm:$0xff] %vm736, %v652
  %768 = vst.msk [vmem:[%s5 + $0xf8] sm:$0xff] %vm736, %v654
  %769 = vst.msk [vmem:[%s5 + $0x100] sm:$0xff] %vm736, %v657
  %770 = vst.msk [vmem:[%s5 + $0x108] sm:$0xff] %vm736, %v659
  %771 = vst.msk [vmem:[%s5 + $0x110] sm:$0xff] %vm736, %v662
  %772 = vst.msk [vmem:[%s5 + $0x118] sm:$0xff] %vm736, %v664
  %773 = vst.msk [vmem:[%s5 + $0x120] sm:$0xff] %vm736, %v667
  %774 = vst.msk [vmem:[%s5 + $0x128] sm:$0xff] %vm736, %v669
  %775 = vst.msk [vmem:[%s5 + $0x130] sm:$0xff] %vm736, %v672
  %776 = vst.msk [vmem:[%s5 + $0x138] sm:$0xff] %vm736, %v674
  %777 = vst.msk [vmem:[%s5 + $0x140] sm:$0xff] %vm736, %v677
  %778 = vst.msk [vmem:[%s5 + $0x148] sm:$0xff] %vm736, %v679
  %779 = vst.msk [vmem:[%s5 + $0x150] sm:$0xff] %vm736, %v682
  %780 = vst.msk [vmem:[%s5 + $0x158] sm:$0xff] %vm736, %v684
  %781 = vst.msk [vmem:[%s5 + $0x160] sm:$0xff] %vm736, %v687
  %782 = vst.msk [vmem:[%s5 + $0x168] sm:$0xff] %vm736, %v689
  %783 = vst.msk [vmem:[%s5 + $0x170] sm:$0xff] %vm736, %v692
  %784 = vst.msk [vmem:[%s5 + $0x178] sm:$0xff] %vm736, %v694
  %785 = vst.msk [vmem:[%s5 + $0x180] sm:$0xff] %vm736, %v697
  %786 = vst.msk [vmem:[%s5 + $0x188] sm:$0xff] %vm736, %v699
  %787 = vst.msk [vmem:[%s5 + $0x190] sm:$0xff] %vm736, %v702
  %788 = vst.msk [vmem:[%s5 + $0x198] sm:$0xff] %vm736, %v704
  %789 = vst.msk [vmem:[%s5 + $0x1a0] sm:$0xff] %vm736, %v707
  %790 = vst.msk [vmem:[%s5 + $0x1a8] sm:$0xff] %vm736, %v709
  %791 = vst.msk [vmem:[%s5 + $0x1b0] sm:$0xff] %vm736, %v712
  %792 = vst.msk [vmem:[%s5 + $0x1b8] sm:$0xff] %vm736, %v714
  %793 = vst.msk [vmem:[%s5 + $0x1c0] sm:$0xff] %vm736, %v717
  %794 = vst.msk [vmem:[%s5 + $0x1c8] sm:$0xff] %vm736, %v719
  %795 = vst.msk [vmem:[%s5 + $0x1d0] sm:$0xff] %vm736, %v722
  %796 = vst.msk [vmem:[%s5 + $0x1d8] sm:$0xff] %vm736, %v724
  %797 = vst.msk [vmem:[%s5 + $0x1e0] sm:$0xff] %vm736, %v727
  %798 = vst.msk [vmem:[%s5 + $0x1e8] sm:$0xff] %vm736, %v729
  %799 = vst.msk [vmem:[%s5 + $0x1f0] sm:$0xff] %vm736, %v732
  %800 = vst.msk [vmem:[%s5 + $0x1f8] sm:$0xff] %vm736, %v734
  // Predicated region
  $region22: #{tpu_custom_call.1} parent=0 // pred_check
    _
  $region23: #{tpu_custom_call.1} parent=0 // pred_check_branch
    %802 = sbr.rel (0) target = $region25
  $region24: #{tpu_custom_call.1} parent=0 // pred_region
    _
  $region25: #{tpu_custom_call.1} parent=0 // pred_fallthru
    _
  // Predicated region
  $region26: #{tpu_custom_call.1} parent=0 // pred_check
    _
  $region27: #{tpu_custom_call.1} parent=0 // pred_check_branch
    %804 = sbr.rel (0) target = $region29
  $region28: #{tpu_custom_call.1} parent=0 // pred_region
    _
  $region29: #{tpu_custom_call.1} parent=0 // pred_fallthru
    _

</llo_original>
